<compile_context>
chip_gen: v6e
topology: v6e:2x2x1
jax: 0.10.0
libtpu: 0.0.40
codegen_flags: <defaults>
</compile_context>

<pallas_src>
import functools

import numpy as np
import jax
import jax.numpy as jnp
from jax.experimental import pallas as pl
from jax.experimental.pallas import tpu as pltpu

# ---- small synthetic configuration (consistent with the module's __init__) ----
B = 2             # batch
N = 16            # tokens (spatial points)
C = 32            # dim / hidden_size
NUM_BLOCKS = 4    # AFNO num_blocks
BLOCK_SIZE = C // NUM_BLOCKS
HSF = 1           # hidden_size_factor
MLP_RATIO = 4.0
H = int(C * MLP_RATIO)
NF = N // 2 + 1   # rfft modes
LN_EPS = 1e-6
SPARSITY = 0.01           # softshrink lambda
HARD_THRESH_FRAC = 1.0    # hard_thresholding_fraction


# ----------------------------- kernel helpers ---------------------------------
def _layernorm(v, gamma, beta, eps):
    mean = jnp.mean(v, axis=-1, keepdims=True)
    var = jnp.mean((v - mean) ** 2, axis=-1, keepdims=True)
    return (v - mean) * jax.lax.rsqrt(var + eps) * gamma + beta


def _softshrink(v, lam):
    # softshrink(v) == relu(v - lam) - relu(-v - lam)   (2 VPU maxes, no selects)
    return jnp.maximum(v - lam, 0.0) - jnp.maximum(-v - lam, 0.0)


def _gelu_tanh(v):
    # tanh-form GELU: single EUP tanh instead of a ~10-op erf polynomial.
    # Numerically within ~1e-5 of exact GELU at the pre-activation magnitudes here.
    return 0.5 * v * (1.0 + jnp.tanh(0.7978845608028654 * (v + 0.044715 * v * v * v)))


# ------------------------------- the kernel -----------------------------------
def _afno_block_kernel(x_ref, vp_ref, f_ref, g_ref, wc_ref, wm1_ref, wm2_ref, o_ref,
                       *, eps, lam, c, c2, ch, hdim, r):
    """Fused AFNO block on a (B*N, C) slab.

    x_ref  : (B*N, C)      input tokens (batches row-stacked)
    vp_ref : (8, >=128)    packed vectors: g1,b1,g2,b2,b1c,b2c,bm1,bm2
    f_ref  : (2R, B*N)     batched block-diag forward real-DFT  [real rows ; imag rows]
    g_ref  : (B*N, 2R)     batched block-diag inverse real-DFT  [real cols | imag cols]
    wc_ref : (c2+ch, *)    rows [:c2] = W1c (c2,ch), rows [c2:] = W2c (ch,c2)
    wm1_ref: (C, H), wm2_ref: (H, C)
    """
    f32 = jnp.float32
    x_in = x_ref[...].astype(f32)                                   # (BN, C)

    g1, be1 = vp_ref[0:1, :c], vp_ref[1:2, :c]
    g2, be2 = vp_ref[2:3, :c], vp_ref[3:4, :c]
    b1c = vp_ref[4:5, :ch]
    b2c = vp_ref[5:6, :c2]
    bm1 = vp_ref[6:7, :hdim]
    bm2 = vp_ref[7:8, :c]

    # ---- norm1 ----
    xn = _layernorm(x_in, g1, be1, eps)                             # (BN, C)

    # ---- AFNO filter: rfft over tokens via ONE stacked real-DFT matmul ----
    fri = jnp.dot(f_ref[...], xn, preferred_element_type=f32)       # (2R, C) = [xr ; xi]
    xl = jnp.concatenate([fri[:r], fri[r:]], axis=1)                # (R, 2C) = [xr | xi]

    # block-diagonal complex MLP, real/imag fused into single matmuls
    w1c = wc_ref[:c2, :ch]                                          # (2C, 2C*hsf)
    w2c = wc_ref[c2:c2 + ch, :c2]                                   # (2C*hsf, 2C)
    o1 = jnp.maximum(jnp.dot(xl, w1c, preferred_element_type=f32) + b1c, 0.0)
    o2 = jnp.dot(o1, w2c, preferred_element_type=f32) + b2c         # (R, 2C)

    # hard thresholding is folded into the truncated DFT operators (wrapper);
    # softshrink (sparsity threshold)
    o2 = _softshrink(o2, lam)

    # irfft back to token space (one matmul) + the filter's internal skip connection
    o2rs = jnp.concatenate([o2[:, :c], o2[:, c:c2]], axis=0)        # (2R, C) = [o2r ; o2i]
    xf = jnp.dot(g_ref[...], o2rs, preferred_element_type=f32) + xn # (BN, C)

    # double_skip_connection=False -> no extra residual here

    # ---- norm2 + MLP (Linear -> GELU -> Linear), dropout=0 ----
    xn2 = _layernorm(xf, g2, be2, eps)
    h = _gelu_tanh(jnp.dot(xn2, wm1_ref[...], preferred_element_type=f32) + bm1)
    y = jnp.dot(h, wm2_ref[...], preferred_element_type=f32) + bm2

    # drop_path = Identity; final residual add
    o_ref[...] = (y + x_in).astype(o_ref.dtype)


# ------------------------------ JAX-side glue ----------------------------------
@functools.lru_cache(maxsize=8)
def _dft_operators(B_, N_, kept, R):
    """Batched block-diagonal truncated real-DFT operators (rfft/irfft, norm='ortho',
    hard-threshold folded in).  Pure shape constants -> built host-side, cached."""
    n_idx = np.arange(N_, dtype=np.float64)
    k_idx = np.arange(kept, dtype=np.float64)
    ang = 2.0 * np.pi * np.outer(k_idx, n_idx) / N_                # (kept, N)
    inv_sqrt_n = 1.0 / np.sqrt(float(N_))
    Fr = np.cos(ang) * inv_sqrt_n
    Fi = -np.sin(ang) * inv_sqrt_n
    wk = np.full((kept,), 2.0)                                      # hermitian weights
    wk[0] = 1.0
    if N_ % 2 == 0 and N_ // 2 < kept:
        wk[N_ // 2] = 1.0
    Gr = (Fr * wk[:, None]).T                                       # (N, kept)
    Gi = (Fi * wk[:, None]).T                                       # (N, kept)

    # F rows: [real block per batch ; imag block per batch], each half padded to R rows.
    Fbig = np.zeros((2 * R, B_ * N_), np.float32)
    Gcat = np.zeros((B_ * N_, 2 * R), np.float32)
    for b in range(B_):
        r0, c0 = b * kept, b * N_
        Fbig[r0:r0 + kept, c0:c0 + N_] = Fr
        Fbig[R + r0:R + r0 + kept, c0:c0 + N_] = Fi
        Gcat[c0:c0 + N_, r0:r0 + kept] = Gr
        Gcat[c0:c0 + N_, R + r0:R + r0 + kept] = Gi
    # (padding rows produce junk after the biased filter MLP, but their Gcat columns are
    #  zero so they contribute nothing to the irfft -> exact semantics preserved.)
    return jnp.asarray(Fbig), jnp.asarray(Gcat)


def _block_diag(w):
    """(nb, di, do) block weights -> dense block-diagonal (nb*di, nb*do)."""
    nb, di, do = w.shape
    m = jnp.zeros((nb * di, nb * do), w.dtype)
    for i in range(nb):
        m = m.at[i * di:(i + 1) * di, i * do:(i + 1) * do].set(w[i])
    return m
    # TODO(synk): at production sizes (C~768, 8 blocks) keep per-block matmuls instead of
    # this dense block-diagonal form (num_blocks x wasted MXU work / VMEM at scale).


def afno_block(x, gamma1, beta1, gamma2, beta2, w1, b1, w2, b2, wm1, bm1, wm2, bm2):
    B_, N_, C_ = x.shape
    f32 = jnp.float32
    Nf = N_ // 2 + 1
    kept = int(Nf * HARD_THRESH_FRAC)          # hard-threshold: only these modes survive
    R = ((B_ * kept + 7) // 8) * 8             # sublane-aligned real/imag row blocks
    H_ = wm1.shape[1]
    C2 = 2 * C_
    CH = 2 * C_ * HSF

    # --- batched block-diagonal DFT operators (both batches in one matmul each)
    Fbig, Gcat = _dft_operators(B_, N_, kept, R)

    # --- complex block-diagonal filter weights, fused real/imag form
    W1r, W1i = _block_diag(w1[0]), _block_diag(w1[1])              # (C, C*HSF)
    W2r, W2i = _block_diag(w2[0]), _block_diag(w2[1])              # (C*HSF, C)
    W1c = jnp.block([[W1r, W1i], [-W1i, W1r]])                     # (2C, 2C*HSF)
    W2c = jnp.block([[W2r, W2i], [-W2i, W2r]])                     # (2C*HSF, 2C)
    Wc = jnp.zeros((C2 + CH, max(CH, C2)), f32)
    Wc = Wc.at[:C2, :CH].set(W1c)
    Wc = Wc.at[C2:, :C2].set(W2c)

    # --- pack all small per-channel vectors into one (8, >=128) parameter block
    VPW = max(128, C_, C2, CH, H_)
    vp = jnp.zeros((8, VPW), f32)
    vp = vp.at[0, :C_].set(gamma1)
    vp = vp.at[1, :C_].set(beta1)
    vp = vp.at[2, :C_].set(gamma2)
    vp = vp.at[3, :C_].set(beta2)
    vp = vp.at[4, :CH].set(jnp.concatenate([b1[0].reshape(-1), b1[1].reshape(-1)]))
    vp = vp.at[5, :C2].set(jnp.concatenate([b2[0].reshape(-1), b2[1].reshape(-1)]))
    vp = vp.at[6, :H_].set(bm1)
    vp = vp.at[7, :C_].set(bm2)

    x2 = x.reshape(B_ * N_, C_)                                    # batches row-stacked
    args = [x2, vp, Fbig, Gcat, Wc, wm1, wm2]

    def full_spec(a):
        nd = a.ndim
        return pl.BlockSpec(a.shape, lambda i, _nd=nd: (0,) * _nd)

    kernel = functools.partial(_afno_block_kernel, eps=LN_EPS, lam=SPARSITY,
                               c=C_, c2=C2, ch=CH, hdim=H_, r=R)

    out2 = pl.pallas_call(
        kernel,
        out_shape=jax.ShapeDtypeStruct((B_ * N_, C_), x.dtype),
        grid_spec=pltpu.PrefetchScalarGridSpec(
            num_scalar_prefetch=0,
            grid=(1,),                                   # single fused invocation
            in_specs=[full_spec(a) for a in args],
            out_specs=pl.BlockSpec((B_ * N_, C_), lambda i: (0, 0)),
        ),
        compiler_params=pltpu.CompilerParams(dimension_semantics=("arbitrary",)),
    )(*args)
    return out2.reshape(B_, N_, C_)


# ---------------------------- pure-JAX reference --------------------------------
def reference_afno_block(x, gamma1, beta1, gamma2, beta2, w1, b1, w2, b2,
                         wm1, bm1, wm2, bm2):
    B_, N_, C_ = x.shape
    Nf = N_ // 2 + 1

    def ln(v, g, b):
        m = v.mean(-1, keepdims=True)
        var = ((v - m) ** 2).mean(-1, keepdims=True)
        return (v - m) / jnp.sqrt(var + LN_EPS) * g + b

    def bmm(v, w):
        return jnp.einsum("bkni,nio->bkno", v, w)

    def softshrink(v, lam):
        return jnp.where(v > lam, v - lam,
                         jnp.where(v < -lam, v + lam, jnp.zeros_like(v)))

    residual = x
    xn = ln(x, gamma1, beta1)

    # AFNO1D filter
    bias = xn
    X = jnp.fft.rfft(xn, axis=1, norm="ortho").reshape(B_, Nf, NUM_BLOCKS, BLOCK_SIZE)
    kept = int(Nf * HARD_THRESH_FRAC)
    o1r = jnp.zeros((B_, Nf, NUM_BLOCKS, BLOCK_SIZE * HSF), jnp.float32)
    o1i = jnp.zeros_like(o1r)
    o2r = jnp.zeros(X.shape, jnp.float32)
    o2i = jnp.zeros(X.shape, jnp.float32)
    o1r = o1r.at[:, :kept].set(jax.nn.relu(
        bmm(X.real[:, :kept], w1[0]) - bmm(X.imag[:, :kept], w1[1]) + b1[0]))
    o1i = o1i.at[:, :kept].set(jax.nn.relu(
        bmm(X.imag[:, :kept], w1[0]) + bmm(X.real[:, :kept], w1[1]) + b1[1]))
    o2r = o2r.at[:, :kept].set(
        bmm(o1r[:, :kept], w2[0]) - bmm(o1i[:, :kept], w2[1]) + b2[0])
    o2i = o2i.at[:, :kept].set(
        bmm(o1i[:, :kept], w2[0]) + bmm(o1r[:, :kept], w2[1]) + b2[1])
    Xo = (softshrink(o2r, SPARSITY) + 1j * softshrink(o2i, SPARSITY)).reshape(B_, Nf, C_)
    xf = jnp.fft.irfft(Xo, n=N_, axis=1, norm="ortho").astype(x.dtype) + bias

    # double_skip_connection=False
    xn2 = ln(xf, gamma2, beta2)
    h = jax.nn.gelu(xn2 @ wm1 + bm1, approximate=False)
    y = h @ wm2 + bm2
    return y + residual


# ------------------------------------ main --------------------------------------
if __name__ == "__main__":
    key = jax.random.PRNGKey(0)
    ks = jax.random.split(key, 10)
    scale = 0.02  # AFNO filter init scale (as in the module)

    x = jax.random.normal(ks[0], (B, N, C), jnp.float32)

    # AFNO filter parameters: w1/b1/w2/b2 with leading dim 2 = (real, imag)
    w1 = scale * jax.random.normal(ks[1], (2, NUM_BLOCKS, BLOCK_SIZE, BLOCK_SIZE * HSF), jnp.float32)
    b1 = scale * jax.random.normal(ks[2], (2, NUM_BLOCKS, BLOCK_SIZE * HSF), jnp.float32)
    w2 = scale * jax.random.normal(ks[3], (2, NUM_BLOCKS, BLOCK_SIZE * HSF, BLOCK_SIZE), jnp.float32)
    b2 = scale * jax.random.normal(ks[4], (2, NUM_BLOCKS, BLOCK_SIZE), jnp.float32)

    # LayerNorm parameters (PyTorch default init: weight=1, bias=0)
    gamma1 = jnp.ones((C,), jnp.float32)
    beta1 = jnp.zeros((C,), jnp.float32)
    gamma2 = jnp.ones((C,), jnp.float32)
    beta2 = jnp.zeros((C,), jnp.float32)

    # MLP parameters (synthetic deterministic init)
    wm1 = scale * jax.random.normal(ks[5], (C, H), jnp.float32)
    bm1 = scale * jax.random.normal(ks[6], (H,), jnp.float32)
    wm2 = scale * jax.random.normal(ks[7], (H, C), jnp.float32)
    bm2 = scale * jax.random.normal(ks[8], (C,), jnp.float32)

    out = afno_block(x, gamma1, beta1, gamma2, beta2, w1, b1, w2, b2, wm1, bm1, wm2, bm2)
    out = jax.block_until_ready(out)

    ref = reference_afno_block(x, gamma1, beta1, gamma2, beta2, w1, b1, w2, b2,
                               wm1, bm1, wm2, bm2)

    assert out.shape == x.shape and out.dtype == x.dtype
    assert bool(jnp.allclose(out, ref, atol=1e-3, rtol=1e-3)), \
        float(jnp.max(jnp.abs(out - ref)))

    print("KERNEL_OK")
</pallas_src>

<mosaic_0001>
module attributes {stable_mosaic.version = 11 : i64} {
  func.func @_afno_block_kernel(%arg0: i32, %arg1: memref<32x32xf32, #tpu.memory_space<vmem>>, %arg2: memref<8x128xf32, #tpu.memory_space<vmem>>, %arg3: memref<48x32xf32, #tpu.memory_space<vmem>>, %arg4: memref<32x48xf32, #tpu.memory_space<vmem>>, %arg5: memref<128x64xf32, #tpu.memory_space<vmem>>, %arg6: memref<32x128xf32, #tpu.memory_space<vmem>>, %arg7: memref<128x32xf32, #tpu.memory_space<vmem>>, %arg8: memref<32x32xf32, #tpu.memory_space<vmem>>) attributes {dimension_semantics = [#tpu.dimension_semantics<arbitrary>], iteration_bounds = array<i64: 1>, scalar_prefetch = 0 : i64, scratch_operands = 0 : i64, tpu.core_type = #tpu.core_type<tc>, window_params = [{pipeline_mode = #tpu.pipeline_mode<synchronous>, transform_indices = @transform_0, window_bounds = array<i64: 32, 32>}, {pipeline_mode = #tpu.pipeline_mode<synchronous>, transform_indices = @transform_1, window_bounds = array<i64: 8, 128>}, {pipeline_mode = #tpu.pipeline_mode<synchronous>, transform_indices = @transform_2, window_bounds = array<i64: 48, 32>}, {pipeline_mode = #tpu.pipeline_mode<synchronous>, transform_indices = @transform_3, window_bounds = array<i64: 32, 48>}, {pipeline_mode = #tpu.pipeline_mode<synchronous>, transform_indices = @transform_4, window_bounds = array<i64: 128, 64>}, {pipeline_mode = #tpu.pipeline_mode<synchronous>, transform_indices = @transform_5, window_bounds = array<i64: 32, 128>}, {pipeline_mode = #tpu.pipeline_mode<synchronous>, transform_indices = @transform_6, window_bounds = array<i64: 128, 32>}, {pipeline_mode = #tpu.pipeline_mode<synchronous>, transform_indices = @transform_7, window_bounds = array<i64: 32, 32>}]} {
    %c0 = arith.constant 0 : index
    %c0_0 = arith.constant 0 : index
    %0 = vector.load %arg1[%c0, %c0_0] : memref<32x32xf32, #tpu.memory_space<vmem>>, vector<32x32xf32>
    %c0_1 = arith.constant 0 : index
    %c0_2 = arith.constant 0 : index
    %1 = vector.load %arg2[%c0_1, %c0_2] : memref<8x128xf32, #tpu.memory_space<vmem>>, vector<1x32xf32>
    %c1 = arith.constant 1 : index
    %c0_3 = arith.constant 0 : index
    %2 = vector.load %arg2[%c1, %c0_3] : memref<8x128xf32, #tpu.memory_space<vmem>>, vector<1x32xf32>
    %c2 = arith.constant 2 : index
    %c0_4 = arith.constant 0 : index
    %3 = vector.load %arg2[%c2, %c0_4] : memref<8x128xf32, #tpu.memory_space<vmem>>, vector<1x32xf32>
    %c3 = arith.constant 3 : index
    %c0_5 = arith.constant 0 : index
    %4 = vector.load %arg2[%c3, %c0_5] : memref<8x128xf32, #tpu.memory_space<vmem>>, vector<1x32xf32>
    %c4 = arith.constant 4 : index
    %c0_6 = arith.constant 0 : index
    %5 = vector.load %arg2[%c4, %c0_6] : memref<8x128xf32, #tpu.memory_space<vmem>>, vector<1x64xf32>
    %c5 = arith.constant 5 : index
    %c0_7 = arith.constant 0 : index
    %6 = vector.load %arg2[%c5, %c0_7] : memref<8x128xf32, #tpu.memory_space<vmem>>, vector<1x64xf32>
    %c6 = arith.constant 6 : index
    %c0_8 = arith.constant 0 : index
    %7 = vector.load %arg2[%c6, %c0_8] : memref<8x128xf32, #tpu.memory_space<vmem>>, vector<1x128xf32>
    %c7 = arith.constant 7 : index
    %c0_9 = arith.constant 0 : index
    %8 = vector.load %arg2[%c7, %c0_9] : memref<8x128xf32, #tpu.memory_space<vmem>>, vector<1x32xf32>
    %cst = arith.constant dense<0.000000e+00> : vector<32xf32>
    %9 = vector.multi_reduction <add>, %0, %cst [1] : vector<32x32xf32> to vector<32xf32>
    %10 = vector.shape_cast %9 : vector<32xf32> to vector<32x1xf32>
    %cst_10 = arith.constant 3.200000e+01 : f32
    %11 = vector.broadcast %cst_10 : f32 to vector<32x1xf32>
    %12 = arith.divf %10, %11 : vector<32x1xf32>
    %13 = vector.broadcast %12 : vector<32x1xf32> to vector<32x32xf32>
    %14 = arith.subf %0, %13 : vector<32x32xf32>
    %15 = arith.mulf %14, %14 : vector<32x32xf32>
    %cst_11 = arith.constant dense<0.000000e+00> : vector<32xf32>
    %16 = vector.multi_reduction <add>, %15, %cst_11 [1] : vector<32x32xf32> to vector<32xf32>
    %17 = vector.shape_cast %16 : vector<32xf32> to vector<32x1xf32>
    %cst_12 = arith.constant 3.200000e+01 : f32
    %18 = vector.broadcast %cst_12 : f32 to vector<32x1xf32>
    %19 = arith.divf %17, %18 : vector<32x1xf32>
    %20 = vector.broadcast %12 : vector<32x1xf32> to vector<32x32xf32>
    %21 = arith.subf %0, %20 : vector<32x32xf32>
    %cst_13 = arith.constant 9.99999997E-7 : f32
    %22 = vector.broadcast %cst_13 : f32 to vector<32x1xf32>
    %23 = arith.addf %19, %22 : vector<32x1xf32>
    %24 = math.rsqrt %23 : vector<32x1xf32>
    %25 = vector.broadcast %24 : vector<32x1xf32> to vector<32x32xf32>
    %26 = arith.mulf %21, %25 : vector<32x32xf32>
    %27 = vector.broadcast %1 : vector<1x32xf32> to vector<32x32xf32>
    %28 = arith.mulf %26, %27 : vector<32x32xf32>
    %29 = vector.broadcast %2 : vector<1x32xf32> to vector<32x32xf32>
    %30 = arith.addf %28, %29 : vector<32x32xf32>
    %c0_14 = arith.constant 0 : index
    %c0_15 = arith.constant 0 : index
    %31 = vector.load %arg3[%c0_14, %c0_15] : memref<48x32xf32, #tpu.memory_space<vmem>>, vector<48x32xf32>
    %cst_16 = arith.constant dense<0.000000e+00> : vector<48x32xf32>
    %32 = tpu.matmul %31, %30, %cst_16 {dimension_numbers = #tpu.dot_dimension_numbers<[1], [0], [0], [1], [0, 0, 1, 1], [], []>} : vector<48x32xf32>, vector<32x32xf32>, vector<48x32xf32> -> vector<48x32xf32>
    %33 = vector.extract_strided_slice %32 {offsets = [0, 0], sizes = [24, 32], strides = [1, 1]} : vector<48x32xf32> to vector<24x32xf32>
    %34 = vector.extract_strided_slice %32 {offsets = [24, 0], sizes = [24, 32], strides = [1, 1]} : vector<48x32xf32> to vector<24x32xf32>
    %35 = tpu.concatenate %33, %34 in 1 : vector<24x32xf32>, vector<24x32xf32> -> vector<24x64xf32>
    %c0_17 = arith.constant 0 : index
    %c0_18 = arith.constant 0 : index
    %36 = vector.load %arg5[%c0_17, %c0_18] : memref<128x64xf32, #tpu.memory_space<vmem>>, vector<64x64xf32>
    %c64 = arith.constant 64 : index
    %c0_19 = arith.constant 0 : index
    %37 = vector.load %arg5[%c64, %c0_19] : memref<128x64xf32, #tpu.memory_space<vmem>>, vector<64x64xf32>
    %cst_20 = arith.constant dense<0.000000e+00> : vector<24x64xf32>
    %38 = tpu.matmul %35, %36, %cst_20 {dimension_numbers = #tpu.dot_dimension_numbers<[1], [0], [0], [1], [0, 0, 1, 1], [], []>} : vector<24x64xf32>, vector<64x64xf32>, vector<24x64xf32> -> vector<24x64xf32>
    %39 = vector.broadcast %5 : vector<1x64xf32> to vector<24x64xf32>
    %40 = arith.addf %38, %39 : vector<24x64xf32>
    %cst_21 = arith.constant 0.000000e+00 : f32
    %41 = vector.broadcast %cst_21 : f32 to vector<24x64xf32>
    %42 = arith.maximumf %40, %41 : vector<24x64xf32>
    %cst_22 = arith.constant dense<0.000000e+00> : vector<24x64xf32>
    %43 = tpu.matmul %42, %37, %cst_22 {dimension_numbers = #tpu.dot_dimension_numbers<[1], [0], [0], [1], [0, 0, 1, 1], [], []>} : vector<24x64xf32>, vector<64x64xf32>, vector<24x64xf32> -> vector<24x64xf32>
    %44 = vector.broadcast %6 : vector<1x64xf32> to vector<24x64xf32>
    %45 = arith.addf %43, %44 : vector<24x64xf32>
    %cst_23 = arith.constant 0.00999999977 : f32
    %46 = vector.broadcast %cst_23 : f32 to vector<24x64xf32>
    %47 = arith.subf %45, %46 : vector<24x64xf32>
    %cst_24 = arith.constant 0.000000e+00 : f32
    %48 = vector.broadcast %cst_24 : f32 to vector<24x64xf32>
    %49 = arith.maximumf %47, %48 : vector<24x64xf32>
    %cst_25 = arith.constant 0.000000e+00 : f32
    %50 = vector.broadcast %cst_25 : f32 to vector<24x64xf32>
    %51 = arith.subf %50, %45 : vector<24x64xf32>
    %cst_26 = arith.constant 0.00999999977 : f32
    %52 = vector.broadcast %cst_26 : f32 to vector<24x64xf32>
    %53 = arith.subf %51, %52 : vector<24x64xf32>
    %cst_27 = arith.constant 0.000000e+00 : f32
    %54 = vector.broadcast %cst_27 : f32 to vector<24x64xf32>
    %55 = arith.maximumf %53, %54 : vector<24x64xf32>
    %56 = arith.subf %49, %55 : vector<24x64xf32>
    %57 = vector.extract_strided_slice %56 {offsets = [0, 0], sizes = [24, 32], strides = [1, 1]} : vector<24x64xf32> to vector<24x32xf32>
    %58 = vector.extract_strided_slice %56 {offsets = [0, 32], sizes = [24, 32], strides = [1, 1]} : vector<24x64xf32> to vector<24x32xf32>
    %59 = tpu.concatenate %57, %58 in 0 : vector<24x32xf32>, vector<24x32xf32> -> vector<48x32xf32>
    %c0_28 = arith.constant 0 : index
    %c0_29 = arith.constant 0 : index
    %60 = vector.load %arg4[%c0_28, %c0_29] : memref<32x48xf32, #tpu.memory_space<vmem>>, vector<32x48xf32>
    %cst_30 = arith.constant dense<0.000000e+00> : vector<32x32xf32>
    %61 = tpu.matmul %60, %59, %cst_30 {dimension_numbers = #tpu.dot_dimension_numbers<[1], [0], [0], [1], [0, 0, 1, 1], [], []>} : vector<32x48xf32>, vector<48x32xf32>, vector<32x32xf32> -> vector<32x32xf32>
    %62 = arith.addf %61, %30 : vector<32x32xf32>
    %cst_31 = arith.constant dense<0.000000e+00> : vector<32xf32>
    %63 = vector.multi_reduction <add>, %62, %cst_31 [1] : vector<32x32xf32> to vector<32xf32>
    %64 = vector.shape_cast %63 : vector<32xf32> to vector<32x1xf32>
    %cst_32 = arith.constant 3.200000e+01 : f32
    %65 = vector.broadcast %cst_32 : f32 to vector<32x1xf32>
    %66 = arith.divf %64, %65 : vector<32x1xf32>
    %67 = vector.broadcast %66 : vector<32x1xf32> to vector<32x32xf32>
    %68 = arith.subf %62, %67 : vector<32x32xf32>
    %69 = arith.mulf %68, %68 : vector<32x32xf32>
    %cst_33 = arith.constant dense<0.000000e+00> : vector<32xf32>
    %70 = vector.multi_reduction <add>, %69, %cst_33 [1] : vector<32x32xf32> to vector<32xf32>
    %71 = vector.shape_cast %70 : vector<32xf32> to vector<32x1xf32>
    %cst_34 = arith.constant 3.200000e+01 : f32
    %72 = vector.broadcast %cst_34 : f32 to vector<32x1xf32>
    %73 = arith.divf %71, %72 : vector<32x1xf32>
    %74 = vector.broadcast %66 : vector<32x1xf32> to vector<32x32xf32>
    %75 = arith.subf %62, %74 : vector<32x32xf32>
    %cst_35 = arith.constant 9.99999997E-7 : f32
    %76 = vector.broadcast %cst_35 : f32 to vector<32x1xf32>
    %77 = arith.addf %73, %76 : vector<32x1xf32>
    %78 = math.rsqrt %77 : vector<32x1xf32>
    %79 = vector.broadcast %78 : vector<32x1xf32> to vector<32x32xf32>
    %80 = arith.mulf %75, %79 : vector<32x32xf32>
    %81 = vector.broadcast %3 : vector<1x32xf32> to vector<32x32xf32>
    %82 = arith.mulf %80, %81 : vector<32x32xf32>
    %83 = vector.broadcast %4 : vector<1x32xf32> to vector<32x32xf32>
    %84 = arith.addf %82, %83 : vector<32x32xf32>
    %c0_36 = arith.constant 0 : index
    %c0_37 = arith.constant 0 : index
    %85 = vector.load %arg6[%c0_36, %c0_37] : memref<32x128xf32, #tpu.memory_space<vmem>>, vector<32x128xf32>
    %cst_38 = arith.constant dense<0.000000e+00> : vector<32x128xf32>
    %86 = tpu.matmul %84, %85, %cst_38 {dimension_numbers = #tpu.dot_dimension_numbers<[1], [0], [0], [1], [0, 0, 1, 1], [], []>} : vector<32x32xf32>, vector<32x128xf32>, vector<32x128xf32> -> vector<32x128xf32>
    %87 = vector.broadcast %7 : vector<1x128xf32> to vector<32x128xf32>
    %88 = arith.addf %86, %87 : vector<32x128xf32>
    %cst_39 = arith.constant 5.000000e-01 : f32
    %89 = vector.broadcast %cst_39 : f32 to vector<32x128xf32>
    %90 = arith.mulf %89, %88 : vector<32x128xf32>
    %cst_40 = arith.constant 4.471500e-02 : f32
    %91 = vector.broadcast %cst_40 : f32 to vector<32x128xf32>
    %92 = arith.mulf %91, %88 : vector<32x128xf32>
    %93 = arith.mulf %92, %88 : vector<32x128xf32>
    %94 = arith.mulf %93, %88 : vector<32x128xf32>
    %95 = arith.addf %88, %94 : vector<32x128xf32>
    %cst_41 = arith.constant 0.797884583 : f32
    %96 = vector.broadcast %cst_41 : f32 to vector<32x128xf32>
    %97 = arith.mulf %96, %95 : vector<32x128xf32>
    %98 = math.tanh %97 : vector<32x128xf32>
    %cst_42 = arith.constant 1.000000e+00 : f32
    %99 = vector.broadcast %cst_42 : f32 to vector<32x128xf32>
    %100 = arith.addf %99, %98 : vector<32x128xf32>
    %101 = arith.mulf %90, %100 : vector<32x128xf32>
    %c0_43 = arith.constant 0 : index
    %c0_44 = arith.constant 0 : index
    %102 = vector.load %arg7[%c0_43, %c0_44] : memref<128x32xf32, #tpu.memory_space<vmem>>, vector<128x32xf32>
    %cst_45 = arith.constant dense<0.000000e+00> : vector<32x32xf32>
    %103 = tpu.matmul %101, %102, %cst_45 {dimension_numbers = #tpu.dot_dimension_numbers<[1], [0], [0], [1], [0, 0, 1, 1], [], []>} : vector<32x128xf32>, vector<128x32xf32>, vector<32x32xf32> -> vector<32x32xf32>
    %104 = vector.broadcast %8 : vector<1x32xf32> to vector<32x32xf32>
    %105 = arith.addf %103, %104 : vector<32x32xf32>
    %106 = arith.addf %105, %0 : vector<32x32xf32>
    %c0_46 = arith.constant 0 : index
    %c0_47 = arith.constant 0 : index
    %107 = vector.load %arg8[%c0_46, %c0_47] : memref<32x32xf32, #tpu.memory_space<vmem>>, vector<32x32xf32>
    tpu.vector_store %arg8[%c0_46, %c0_47], %106 {strides = array<i32>} : memref<32x32xf32, #tpu.memory_space<vmem>>, vector<32x32xf32>,
    return
  }
  func.func @transform_0(%arg0: i32) -> (i32, i32) {
    %c0_i32 = arith.constant 0 : i32
    %c0_i32_0 = arith.constant 0 : i32
    %c0_i32_1 = arith.constant 0 : i32
    return %c0_i32, %c0_i32_0 : i32, i32
  }
  func.func @transform_1(%arg0: i32) -> (i32, i32) {
    %c0_i32 = arith.constant 0 : i32
    %c0_i32_0 = arith.constant 0 : i32
    %c0_i32_1 = arith.constant 0 : i32
    return %c0_i32, %c0_i32_0 : i32, i32
  }
  func.func @transform_2(%arg0: i32) -> (i32, i32) {
    %c0_i32 = arith.constant 0 : i32
    %c0_i32_0 = arith.constant 0 : i32
    %c0_i32_1 = arith.constant 0 : i32
    return %c0_i32, %c0_i32_0 : i32, i32
  }
  func.func @transform_3(%arg0: i32) -> (i32, i32) {
    %c0_i32 = arith.constant 0 : i32
    %c0_i32_0 = arith.constant 0 : i32
    %c0_i32_1 = arith.constant 0 : i32
    return %c0_i32, %c0_i32_0 : i32, i32
  }
  func.func @transform_4(%arg0: i32) -> (i32, i32) {
    %c0_i32 = arith.constant 0 : i32
    %c0_i32_0 = arith.constant 0 : i32
    %c0_i32_1 = arith.constant 0 : i32
    return %c0_i32, %c0_i32_0 : i32, i32
  }
  func.func @transform_5(%arg0: i32) -> (i32, i32) {
    %c0_i32 = arith.constant 0 : i32
    %c0_i32_0 = arith.constant 0 : i32
    %c0_i32_1 = arith.constant 0 : i32
    return %c0_i32, %c0_i32_0 : i32, i32
  }
  func.func @transform_6(%arg0: i32) -> (i32, i32) {
    %c0_i32 = arith.constant 0 : i32
    %c0_i32_0 = arith.constant 0 : i32
    %c0_i32_1 = arith.constant 0 : i32
    return %c0_i32, %c0_i32_0 : i32, i32
  }
  func.func @transform_7(%arg0: i32) -> (i32, i32) {
    %c0_i32 = arith.constant 0 : i32
    %c0_i32_0 = arith.constant 0 : i32
    %c0_i32_1 = arith.constant 0 : i32
    return %c0_i32, %c0_i32_0 : i32, i32
  }
}

</mosaic_0001>

<llo_original>
// kernel: tpu_custom_call.1
$region0: #{tpu_custom_call.1}
  #allocation0 [shape = 'u32[]', space=smem, size = 0x4, offset = 0x4, fixed_abs, tag = 'smem constant byte address 0x4 - core index']
  #allocation1 [shape = 'u32[144,128]{1,0:T(1,128)}', space=vmem, size = 0x12000, scoped, tag = 'internal scratch']
  %s0 = inlined_call_operand.vmem [shape: f32[32,32], index: 0, kind: input, shape index: {}]
  %s1 = inlined_call_operand.vmem [shape: f32[8,128], index: 1, kind: input, shape index: {}]
  %s2 = inlined_call_operand.vmem [shape: f32[48,32], index: 2, kind: input, shape index: {}]
  %s3 = inlined_call_operand.vmem [shape: f32[32,48], index: 3, kind: input, shape index: {}]
  %s4 = inlined_call_operand.vmem [shape: f32[128,64], index: 4, kind: input, shape index: {}]
  %s5 = inlined_call_operand.vmem [shape: f32[32,128], index: 5, kind: input, shape index: {}]
  %s6 = inlined_call_operand.vmem [shape: f32[128,32], index: 6, kind: input, shape index: {}]
  %s7 = inlined_call_operand.hbm [shape: f32[32,32], index: 7, kind: output, shape index: {}]
  %s8 = sld [smem:[#allocation0]]
  $region38: #{tpu_custom_call.1} parent=0
    _
  %s10 = ssub.s32 1, %s8
  %s11 = scalar_select 0, %s10, %s8
  $region1: #{tpu_custom_call.1} parent=0
    #allocation2 [shape = 'u8[16384]{0}', space=vmem, size = 0x4000, scoped, tag = 'output window, operand 0, single buffered']
    #allocation3 [shape = 's32[1]{0}', space=sflag, size = 0x4, scoped, tag = 'scoped memory for tpu_custom_call.1']
    %12 = vsyncpa [#allocation3], 0
    // Predicated region
    $region2: #{tpu_custom_call.1} parent=1 // pred_check
      _
    $region3: #{tpu_custom_call.1} parent=1 // pred_check_branch
      %14 = sbr.rel (0) target = $region5
    $region4: #{tpu_custom_call.1} parent=1 // pred_region
      _
    $region5: #{tpu_custom_call.1} parent=1 // pred_fallthru
      _
    // Predicated region
    $region6: #{tpu_custom_call.1} parent=1 // pred_check
      _
    $region7: #{tpu_custom_call.1} parent=1 // pred_check_branch
      %16 = sbr.rel (0) target = $region9
    $region8: #{tpu_custom_call.1} parent=1 // pred_region
      _
    $region9: #{tpu_custom_call.1} parent=1 // pred_fallthru
      _
    // Predicated region
    $region10: #{tpu_custom_call.1} parent=1 // pred_check
      _
    $region11: #{tpu_custom_call.1} parent=1 // pred_check_branch
      %18 = sbr.rel (0) target = $region13
    $region12: #{tpu_custom_call.1} parent=1 // pred_region
      _
    $region13: #{tpu_custom_call.1} parent=1 // pred_fallthru
      _
    // Predicated region
    $region14: #{tpu_custom_call.1} parent=1 // pred_check
      _
    $region15: #{tpu_custom_call.1} parent=1 // pred_check_branch
      %20 = sbr.rel (0) target = $region17
    $region16: #{tpu_custom_call.1} parent=1 // pred_region
      _
    $region17: #{tpu_custom_call.1} parent=1 // pred_fallthru
      _
    // Predicated region
    $region18: #{tpu_custom_call.1} parent=1 // pred_check
      _
    $region19: #{tpu_custom_call.1} parent=1 // pred_check_branch
      %22 = sbr.rel (0) target = $region21
    $region20: #{tpu_custom_call.1} parent=1 // pred_region
      _
    $region21: #{tpu_custom_call.1} parent=1 // pred_fallthru
      _
    // Predicated region
    $region22: #{tpu_custom_call.1} parent=1 // pred_check
      _
    $region23: #{tpu_custom_call.1} parent=1 // pred_check_branch
      %24 = sbr.rel (0) target = $region25
    $region24: #{tpu_custom_call.1} parent=1 // pred_region
      _
    $region25: #{tpu_custom_call.1} parent=1 // pred_fallthru
      _
    // Predicated region
    $region26: #{tpu_custom_call.1} parent=1 // pred_check
      _
    $region27: #{tpu_custom_call.1} parent=1 // pred_check_branch
      %26 = sbr.rel (0) target = $region29
    $region28: #{tpu_custom_call.1} parent=1 // pred_region
      _
    $region29: #{tpu_custom_call.1} parent=1 // pred_fallthru
      _
    %v27 = vld [vmem:[%s0] sm:$0xff]
    %v28 = vld [vmem:[%s0 + $0x8] sm:$0xff]
    %v29 = vld [vmem:[%s0 + $0x10] sm:$0xff]
    %v30 = vld [vmem:[%s0 + $0x18] sm:$0xff]
    %v31 = vld [vmem:[%s1] sm:$0x1]
    %v32 = vld [vmem:[%s1 + $0x1] sm:$0x1]
    %v33 = vld [vmem:[%s1 + $0x2] sm:$0x1]
    %v34 = vld [vmem:[%s1 + $0x3] sm:$0x1]
    %v35 = vld [vmem:[%s1 + $0x4] sm:$0x1]
    %v36 = vld [vmem:[%s1 + $0x5] sm:$0x1]
    %v37 = vld [vmem:[%s1 + $0x6] sm:$0x1]
    %v38 = vld [vmem:[%s1 + $0x7] sm:$0x1]
    %vm39 = vcmask 261120
    %v40 = vsel %vm39, %v27, 0.0
    %41 = vadd.xlane.f32.xlu0 %v40
    %v42 = vpop.xlane.xlu0 %41
    %v43 = vsel %vm39, %v28, 0.0
    %44 = vadd.xlane.f32.xlu0 %v43
    %v45 = vpop.xlane.xlu0 %44
    %v46 = vsel %vm39, %v29, 0.0
    %47 = vadd.xlane.f32.xlu0 %v46
    %v48 = vpop.xlane.xlu0 %47
    %v49 = vsel %vm39, %v30, 0.0
    %50 = vadd.xlane.f32.xlu0 %v49
    %v51 = vpop.xlane.xlu0 %50
    %v52 = vrcp.pop 32.0
    %v53 = vmul.f32 %v42, %v52
    %v54 = vmul.f32 %v45, %v52
    %v55 = vmul.f32 %v48, %v52
    %v56 = vmul.f32 %v51, %v52
    %v57 = vsub.f32 %v27, %v53
    %v58 = vsub.f32 %v28, %v54
    %v59 = vsub.f32 %v29, %v55
    %v60 = vsub.f32 %v30, %v56
    %v61 = vmul.f32 %v57, %v57
    %v62 = vmul.f32 %v58, %v58
    %v63 = vmul.f32 %v59, %v59
    %v64 = vmul.f32 %v60, %v60
    %v65 = vsel %vm39, %v61, 0.0
    %66 = vadd.xlane.f32.xlu0 %v65
    %v67 = vpop.xlane.xlu0 %66
    %v68 = vsel %vm39, %v62, 0.0
    %69 = vadd.xlane.f32.xlu0 %v68
    %v70 = vpop.xlane.xlu0 %69
    %v71 = vsel %vm39, %v63, 0.0
    %72 = vadd.xlane.f32.xlu0 %v71
    %v73 = vpop.xlane.xlu0 %72
    %v74 = vsel %vm39, %v64, 0.0
    %75 = vadd.xlane.f32.xlu0 %v74
    %v76 = vpop.xlane.xlu0 %75
    %v77 = vmul.f32 %v67, %v52
    %v78 = vmul.f32 %v70, %v52
    %v79 = vmul.f32 %v73, %v52
    %v80 = vmul.f32 %v76, %v52
    %v81 = vadd.f32 %v77, 1e-06
    %v82 = vadd.f32 %v78, 1e-06
    %v83 = vadd.f32 %v79, 1e-06
    %v84 = vadd.f32 %v80, 1e-06
    %v85 = vrsqrt.pop %v81
    %v86 = vrsqrt.pop %v82
    %v87 = vrsqrt.pop %v83
    %v88 = vrsqrt.pop %v84
    %v89 = vmul.f32 %v57, %v85
    %v90 = vmul.f32 %v58, %v86
    %v91 = vmul.f32 %v59, %v87
    %v92 = vmul.f32 %v60, %v88
    %v93 = vlaneseq
    %v94 = vshrl.u32 %v93, 7
    %v95 = vsub.s32 0, %v94
    %v96 = vrot.slane %v31, %v95
    %v97 = vmul.f32 %v89, %v96
    %v98 = vmul.f32 %v90, %v96
    %v99 = vmul.f32 %v91, %v96
    %v100 = vmul.f32 %v92, %v96
    %v101 = vlaneseq
    %v102 = vshrl.u32 %v101, 7
    %v103 = vsub.s32 0, %v102
    %v104 = vrot.slane %v32, %v103
    %v105 = vadd.f32 %v97, %v104
    %v106 = vadd.f32 %v98, %v104
    %v107 = vadd.f32 %v99, %v104
    %v108 = vadd.f32 %v100, %v104
    %v109 = vld [vmem:[%s2] sm:$0xff]
    %v110 = vld [vmem:[%s2 + $0x8] sm:$0xff]
    %v111 = vld [vmem:[%s2 + $0x10] sm:$0xff]
    %v112 = vld [vmem:[%s2 + $0x18] sm:$0xff]
    %v113 = vld [vmem:[%s2 + $0x20] sm:$0xff]
    %v114 = vld [vmem:[%s2 + $0x28] sm:$0xff]
    %v116 = vsel %vm39, %v109, 0
    %v119 = vsel %vm39, %v110, 0
    %v122 = vsel %vm39, %v111, 0
    %v125 = vsel %vm39, %v112, 0
    %v128 = vsel %vm39, %v113, 0
    %v131 = vsel %vm39, %v114, 0
    %133 = vmatprep.subr.mxu0 0.0
    %134 = vmatpush1.msra.mxu0 0.0
    %135 = vmatprep.subr.mxu0 0.0
    %136 = vmatpush1.msra.mxu0 0.0
    %137 = vmatprep.subr.mxu0 0.0
    %138 = vmatpush1.msra.mxu0 0.0
    %139 = vmatprep.subr.mxu0 0.0
    %140 = vmatpush1.msra.mxu0 0.0
    %141 = vmatprep.subr.mxu0 0.0
    %142 = vmatpush1.msra.mxu0 0.0
    %143 = vmatprep.subr.mxu0 0.0
    %144 = vmatpush1.msra.mxu0 0.0
    %145 = vmatprep.subr.mxu0 0.0
    %146 = vmatpush1.msra.mxu0 0.0
    %147 = vmatprep.subr.mxu0 0.0
    %148 = vmatpush1.msra.mxu0 0.0
    %149 = vmatprep.subr.mxu0 0.0
    %150 = vmatpush1.msra.mxu0 0.0
    %151 = vmatprep.subr.mxu0 0.0
    %152 = vmatpush1.msra.mxu0 0.0
    %153 = vmatprep.subr.mxu0 0.0
    %154 = vmatpush1.msra.mxu0 0.0
    %155 = vmatprep.subr.mxu0 0.0
    %156 = vmatpush1.msra.mxu0 0.0
    %157 = vmatprep.subr.mxu0 0.0
    %158 = vmatpush1.msra.mxu0 %v108
    %159 = vmatprep.subr.mxu0 0.0
    %160 = vmatpush1.msra.mxu0 %v107
    %161 = vmatprep.subr.mxu0 0.0
    %162 = vmatpush1.msra.mxu0 %v106
    %163 = vmatprep.subr.mxu0 0.0
    %164 = vmatpush1.msra.mxu0 %v105
    %165 = vmatprep.subr.mxu0 0.0
    %166 = vmatpush2.msra.mxu0 0.0
    %167 = vmatprep.subr.mxu0 0.0
    %168 = vmatpush2.msra.mxu0 0.0
    %169 = vmatprep.subr.mxu0 0.0
    %170 = vmatpush2.msra.mxu0 0.0
    %171 = vmatprep.subr.mxu0 0.0
    %172 = vmatpush2.msra.mxu0 0.0
    %173 = vmatprep.subr.mxu0 0.0
    %174 = vmatpush2.msra.mxu0 0.0
    %175 = vmatprep.subr.mxu0 0.0
    %176 = vmatpush2.msra.mxu0 0.0
    %177 = vmatprep.subr.mxu0 0.0
    %178 = vmatpush2.msra.mxu0 0.0
    %179 = vmatprep.subr.mxu0 0.0
    %180 = vmatpush2.msra.mxu0 0.0
    %181 = vmatprep.subr.mxu0 0.0
    %182 = vmatpush2.msra.mxu0 0.0
    %183 = vmatprep.subr.mxu0 0.0
    %184 = vmatpush2.msra.mxu0 0.0
    %185 = vmatprep.subr.mxu0 0.0
    %186 = vmatpush2.msra.mxu0 0.0
    %187 = vmatprep.subr.mxu0 0.0
    %188 = vmatpush2.msra.mxu0 0.0
    %189 = vmatprep.subr.mxu0 0.0
    %190 = vmatpush2.msra.mxu0 0.0
    %191 = vmatprep.subr.mxu0 0.0
    %192 = vmatpush2.msra.mxu0 0.0
    %193 = vmatprep.subr.mxu0 0.0
    %194 = vmatpush2.msra.mxu0 0.0
    %195 = vmatprep.subr.mxu0 0.0
    %196 = vmatpush2.msra.mxu0 0.0
    %197 = vmatprep.mubr.f32.mxu0 0.0
    %198 = vmatmul.mubr.f32.gmra.mxu0 %v116
    %v199 = vpop.f32.mrf.mxu0
    %v200 = vadd.f32 0.0, %v199
    %v201 = vpop.f32.mrf.mxu0
    %202 = vmatprep.mubr.f32.mxu0 0.0
    %203 = vmatmul.mubr.f32.gmra.mxu0 %v119
    %v204 = vpop.f32.mrf.mxu0
    %v205 = vadd.f32 0.0, %v204
    %v206 = vpop.f32.mrf.mxu0
    %207 = vmatprep.mubr.f32.mxu0 0.0
    %208 = vmatmul.mubr.f32.gmra.mxu0 %v122
    %v209 = vpop.f32.mrf.mxu0
    %v210 = vadd.f32 0.0, %v209
    %v211 = vpop.f32.mrf.mxu0
    %212 = vmatprep.mubr.f32.mxu0 0.0
    %213 = vmatmul.mubr.f32.gmra.mxu0 %v125
    %v214 = vpop.f32.mrf.mxu0
    %v215 = vadd.f32 0.0, %v214
    %v216 = vpop.f32.mrf.mxu0
    %217 = vmatprep.mubr.f32.mxu0 0.0
    %218 = vmatmul.mubr.f32.gmra.mxu0 %v128
    %v219 = vpop.f32.mrf.mxu0
    %v220 = vadd.f32 0.0, %v219
    %v221 = vpop.f32.mrf.mxu0
    %222 = vmatprep.mubr.f32.mxu0 0.0
    %223 = vmatmul.mubr.f32.gmra.mxu0 %v131
    %v224 = vpop.f32.mrf.mxu0
    %v225 = vadd.f32 0.0, %v224
    %v226 = vpop.f32.mrf.mxu0
    %227 = vdwg.mxu0
    %231 = vrot.lane.b32.xlu0 %v215, 32
    %v232 = vpop.permute.xlu0 %231
    %233 = vrot.lane.b32.xlu0 %v220, 32
    %v234 = vpop.permute.xlu0 %233
    %235 = vrot.lane.b32.xlu0 %v225, 32
    %v236 = vpop.permute.xlu0 %235
    %v240 = vsel %vm39, %v200, %v232
    %v241 = vsel %vm39, %v205, %v234
    %v242 = vsel %vm39, %v210, %v236
    %v243 = vld [vmem:[%s4] sm:$0xff]
    %v244 = vld [vmem:[%s4 + $0x8] sm:$0xff]
    %v245 = vld [vmem:[%s4 + $0x10] sm:$0xff]
    %v246 = vld [vmem:[%s4 + $0x18] sm:$0xff]
    %v247 = vld [vmem:[%s4 + $0x20] sm:$0xff]
    %v248 = vld [vmem:[%s4 + $0x28] sm:$0xff]
    %v249 = vld [vmem:[%s4 + $0x30] sm:$0xff]
    %v250 = vld [vmem:[%s4 + $0x38] sm:$0xff]
    %v251 = vld [vmem:[%s4 + $0x40] sm:$0xff]
    %v252 = vld [vmem:[%s4 + $0x48] sm:$0xff]
    %v253 = vld [vmem:[%s4 + $0x50] sm:$0xff]
    %v254 = vld [vmem:[%s4 + $0x58] sm:$0xff]
    %v255 = vld [vmem:[%s4 + $0x60] sm:$0xff]
    %v256 = vld [vmem:[%s4 + $0x68] sm:$0xff]
    %v257 = vld [vmem:[%s4 + $0x70] sm:$0xff]
    %v258 = vld [vmem:[%s4 + $0x78] sm:$0xff]
    %v259 = vlaneseq
    %v260 = vshrl.u32 %v259, 7
    %v261 = vsub.s32 0, %v260
    %v262 = vrot.slane %v35, %v261
    %vm263 = vcmask 523264
    %v265 = vsel %vm263, %v240, 0
    %v268 = vsel %vm263, %v241, 0
    %v271 = vsel %vm263, %v242, 0
    %273 = vmatprep.subr.mxu0 0.0
    %274 = vmatpush1.msra.mxu0 0.0
    %275 = vmatprep.subr.mxu0 0.0
    %276 = vmatpush1.msra.mxu0 0.0
    %277 = vmatprep.subr.mxu0 0.0
    %278 = vmatpush1.msra.mxu0 0.0
    %279 = vmatprep.subr.mxu0 0.0
    %280 = vmatpush1.msra.mxu0 0.0
    %281 = vmatprep.subr.mxu0 0.0
    %282 = vmatpush1.msra.mxu0 0.0
    %283 = vmatprep.subr.mxu0 0.0
    %284 = vmatpush1.msra.mxu0 0.0
    %285 = vmatprep.subr.mxu0 0.0
    %286 = vmatpush1.msra.mxu0 0.0
    %287 = vmatprep.subr.mxu0 0.0
    %288 = vmatpush1.msra.mxu0 0.0
    %289 = vmatprep.subr.mxu0 0.0
    %290 = vmatpush1.msra.mxu0 %v250
    %291 = vmatprep.subr.mxu0 0.0
    %292 = vmatpush1.msra.mxu0 %v249
    %293 = vmatprep.subr.mxu0 0.0
    %294 = vmatpush1.msra.mxu0 %v248
    %295 = vmatprep.subr.mxu0 0.0
    %296 = vmatpush1.msra.mxu0 %v247
    %297 = vmatprep.subr.mxu0 0.0
    %298 = vmatpush1.msra.mxu0 %v246
    %299 = vmatprep.subr.mxu0 0.0
    %300 = vmatpush1.msra.mxu0 %v245
    %301 = vmatprep.subr.mxu0 0.0
    %302 = vmatpush1.msra.mxu0 %v244
    %303 = vmatprep.subr.mxu0 0.0
    %304 = vmatpush1.msra.mxu0 %v243
    %305 = vmatprep.subr.mxu0 0.0
    %306 = vmatpush2.msra.mxu0 0.0
    %307 = vmatprep.subr.mxu0 0.0
    %308 = vmatpush2.msra.mxu0 0.0
    %309 = vmatprep.subr.mxu0 0.0
    %310 = vmatpush2.msra.mxu0 0.0
    %311 = vmatprep.subr.mxu0 0.0
    %312 = vmatpush2.msra.mxu0 0.0
    %313 = vmatprep.subr.mxu0 0.0
    %314 = vmatpush2.msra.mxu0 0.0
    %315 = vmatprep.subr.mxu0 0.0
    %316 = vmatpush2.msra.mxu0 0.0
    %317 = vmatprep.subr.mxu0 0.0
    %318 = vmatpush2.msra.mxu0 0.0
    %319 = vmatprep.subr.mxu0 0.0
    %320 = vmatpush2.msra.mxu0 0.0
    %321 = vmatprep.subr.mxu0 0.0
    %322 = vmatpush2.msra.mxu0 0.0
    %323 = vmatprep.subr.mxu0 0.0
    %324 = vmatpush2.msra.mxu0 0.0
    %325 = vmatprep.subr.mxu0 0.0
    %326 = vmatpush2.msra.mxu0 0.0
    %327 = vmatprep.subr.mxu0 0.0
    %328 = vmatpush2.msra.mxu0 0.0
    %329 = vmatprep.subr.mxu0 0.0
    %330 = vmatpush2.msra.mxu0 0.0
    %331 = vmatprep.subr.mxu0 0.0
    %332 = vmatpush2.msra.mxu0 0.0
    %333 = vmatprep.subr.mxu0 0.0
    %334 = vmatpush2.msra.mxu0 0.0
    %335 = vmatprep.subr.mxu0 0.0
    %336 = vmatpush2.msra.mxu0 0.0
    %337 = vmatprep.mubr.f32.mxu0 0.0
    %338 = vmatmul.mubr.f32.gmra.mxu0 %v265
    %v339 = vpop.f32.mrf.mxu0
    %v340 = vadd.f32 %v262, %v339
    %v341 = vpop.f32.mrf.mxu0
    %342 = vmatprep.mubr.f32.mxu0 0.0
    %343 = vmatmul.mubr.f32.gmra.mxu0 %v268
    %v344 = vpop.f32.mrf.mxu0
    %v345 = vadd.f32 %v262, %v344
    %v346 = vpop.f32.mrf.mxu0
    %347 = vmatprep.mubr.f32.mxu0 0.0
    %348 = vmatmul.mubr.f32.gmra.mxu0 %v271
    %v349 = vpop.f32.mrf.mxu0
    %v350 = vadd.f32 %v262, %v349
    %v351 = vpop.f32.mrf.mxu0
    %352 = vdwg.mxu0
    %v353 = vmax.f32 %v340, 0.0
    %v354 = vmax.f32 %v345, 0.0
    %v355 = vmax.f32 %v350, 0.0
    %v356 = vlaneseq
    %v357 = vshrl.u32 %v356, 7
    %v358 = vsub.s32 0, %v357
    %v359 = vrot.slane %v36, %v358
    %v361 = vsel %vm263, %v353, 0
    %v364 = vsel %vm263, %v354, 0
    %v367 = vsel %vm263, %v355, 0
    %369 = vmatprep.subr.mxu0 0.0
    %370 = vmatpush1.msra.mxu0 0.0
    %371 = vmatprep.subr.mxu0 0.0
    %372 = vmatpush1.msra.mxu0 0.0
    %373 = vmatprep.subr.mxu0 0.0
    %374 = vmatpush1.msra.mxu0 0.0
    %375 = vmatprep.subr.mxu0 0.0
    %376 = vmatpush1.msra.mxu0 0.0
    %377 = vmatprep.subr.mxu0 0.0
    %378 = vmatpush1.msra.mxu0 0.0
    %379 = vmatprep.subr.mxu0 0.0
    %380 = vmatpush1.msra.mxu0 0.0
    %381 = vmatprep.subr.mxu0 0.0
    %382 = vmatpush1.msra.mxu0 0.0
    %383 = vmatprep.subr.mxu0 0.0
    %384 = vmatpush1.msra.mxu0 0.0
    %385 = vmatprep.subr.mxu0 0.0
    %386 = vmatpush1.msra.mxu0 %v258
    %387 = vmatprep.subr.mxu0 0.0
    %388 = vmatpush1.msra.mxu0 %v257
    %389 = vmatprep.subr.mxu0 0.0
    %390 = vmatpush1.msra.mxu0 %v256
    %391 = vmatprep.subr.mxu0 0.0
    %392 = vmatpush1.msra.mxu0 %v255
    %393 = vmatprep.subr.mxu0 0.0
    %394 = vmatpush1.msra.mxu0 %v254
    %395 = vmatprep.subr.mxu0 0.0
    %396 = vmatpush1.msra.mxu0 %v253
    %397 = vmatprep.subr.mxu0 0.0
    %398 = vmatpush1.msra.mxu0 %v252
    %399 = vmatprep.subr.mxu0 0.0
    %400 = vmatpush1.msra.mxu0 %v251
    %401 = vmatprep.subr.mxu0 0.0
    %402 = vmatpush2.msra.mxu0 0.0
    %403 = vmatprep.subr.mxu0 0.0
    %404 = vmatpush2.msra.mxu0 0.0
    %405 = vmatprep.subr.mxu0 0.0
    %406 = vmatpush2.msra.mxu0 0.0
    %407 = vmatprep.subr.mxu0 0.0
    %408 = vmatpush2.msra.mxu0 0.0
    %409 = vmatprep.subr.mxu0 0.0
    %410 = vmatpush2.msra.mxu0 0.0
    %411 = vmatprep.subr.mxu0 0.0
    %412 = vmatpush2.msra.mxu0 0.0
    %413 = vmatprep.subr.mxu0 0.0
    %414 = vmatpush2.msra.mxu0 0.0
    %415 = vmatprep.subr.mxu0 0.0
    %416 = vmatpush2.msra.mxu0 0.0
    %417 = vmatprep.subr.mxu0 0.0
    %418 = vmatpush2.msra.mxu0 0.0
    %419 = vmatprep.subr.mxu0 0.0
    %420 = vmatpush2.msra.mxu0 0.0
    %421 = vmatprep.subr.mxu0 0.0
    %422 = vmatpush2.msra.mxu0 0.0
    %423 = vmatprep.subr.mxu0 0.0
    %424 = vmatpush2.msra.mxu0 0.0
    %425 = vmatprep.subr.mxu0 0.0
    %426 = vmatpush2.msra.mxu0 0.0
    %427 = vmatprep.subr.mxu0 0.0
    %428 = vmatpush2.msra.mxu0 0.0
    %429 = vmatprep.subr.mxu0 0.0
    %430 = vmatpush2.msra.mxu0 0.0
    %431 = vmatprep.subr.mxu0 0.0
    %432 = vmatpush2.msra.mxu0 0.0
    %433 = vmatprep.mubr.f32.mxu0 0.0
    %434 = vmatmul.mubr.f32.gmra.mxu0 %v361
    %v435 = vpop.f32.mrf.mxu0
    %v436 = vadd.f32 %v359, %v435
    %v437 = vpop.f32.mrf.mxu0
    %438 = vmatprep.mubr.f32.mxu0 0.0
    %439 = vmatmul.mubr.f32.gmra.mxu0 %v364
    %v440 = vpop.f32.mrf.mxu0
    %v441 = vadd.f32 %v359, %v440
    %v442 = vpop.f32.mrf.mxu0
    %443 = vmatprep.mubr.f32.mxu0 0.0
    %444 = vmatmul.mubr.f32.gmra.mxu0 %v367
    %v445 = vpop.f32.mrf.mxu0
    %v446 = vadd.f32 %v359, %v445
    %v447 = vpop.f32.mrf.mxu0
    %448 = vdwg.mxu0
    %v449 = vsub.f32 %v436, 0.01
    %v450 = vsub.f32 %v441, 0.01
    %v451 = vsub.f32 %v446, 0.01
    %v452 = vmax.f32 %v449, 0.0
    %v453 = vmax.f32 %v450, 0.0
    %v454 = vmax.f32 %v451, 0.0
    %v455 = vsub.f32 0.0, %v436
    %v456 = vsub.f32 0.0, %v441
    %v457 = vsub.f32 0.0, %v446
    %v458 = vsub.f32 %v455, 0.01
    %v459 = vsub.f32 %v456, 0.01
    %v460 = vsub.f32 %v457, 0.01
    %v461 = vmax.f32 %v458, 0.0
    %v462 = vmax.f32 %v459, 0.0
    %v463 = vmax.f32 %v460, 0.0
    %v464 = vsub.f32 %v452, %v461
    %v465 = vsub.f32 %v453, %v462
    %v466 = vsub.f32 %v454, %v463
    %470 = vrot.lane.b32.xlu0 %v464, 96
    %v471 = vpop.permute.xlu0 %470
    %472 = vrot.lane.b32.xlu0 %v465, 96
    %v473 = vpop.permute.xlu0 %472
    %474 = vrot.lane.b32.xlu0 %v466, 96
    %v475 = vpop.permute.xlu0 %474
    %v479 = vld [vmem:[%s3] sm:$0xff]
    %v480 = vld [vmem:[%s3 + $0x8] sm:$0xff]
    %v481 = vld [vmem:[%s3 + $0x10] sm:$0xff]
    %v482 = vld [vmem:[%s3 + $0x18] sm:$0xff]
    %vm483 = vcmask 392192
    %v485 = vsel %vm483, %v479, 0
    %v488 = vsel %vm483, %v480, 0
    %v491 = vsel %vm483, %v481, 0
    %v494 = vsel %vm483, %v482, 0
    %496 = vmatprep.subr.mxu0 0.0
    %497 = vmatpush1.msra.mxu0 0.0
    %498 = vmatprep.subr.mxu0 0.0
    %499 = vmatpush1.msra.mxu0 0.0
    %500 = vmatprep.subr.mxu0 0.0
    %501 = vmatpush1.msra.mxu0 0.0
    %502 = vmatprep.subr.mxu0 0.0
    %503 = vmatpush1.msra.mxu0 0.0
    %504 = vmatprep.subr.mxu0 0.0
    %505 = vmatpush1.msra.mxu0 0.0
    %506 = vmatprep.subr.mxu0 0.0
    %507 = vmatpush1.msra.mxu0 0.0
    %508 = vmatprep.subr.mxu0 0.0
    %509 = vmatpush1.msra.mxu0 0.0
    %510 = vmatprep.subr.mxu0 0.0
    %511 = vmatpush1.msra.mxu0 0.0
    %512 = vmatprep.subr.mxu0 0.0
    %513 = vmatpush1.msra.mxu0 0.0
    %514 = vmatprep.subr.mxu0 0.0
    %515 = vmatpush1.msra.mxu0 0.0
    %516 = vmatprep.subr.mxu0 0.0
    %517 = vmatpush1.msra.mxu0 %v475
    %518 = vmatprep.subr.mxu0 0.0
    %519 = vmatpush1.msra.mxu0 %v473
    %520 = vmatprep.subr.mxu0 0.0
    %521 = vmatpush1.msra.mxu0 %v471
    %522 = vmatprep.subr.mxu0 0.0
    %523 = vmatpush1.msra.mxu0 %v466
    %524 = vmatprep.subr.mxu0 0.0
    %525 = vmatpush1.msra.mxu0 %v465
    %526 = vmatprep.subr.mxu0 0.0
    %527 = vmatpush1.msra.mxu0 %v464
    %528 = vmatprep.subr.mxu0 0.0
    %529 = vmatpush2.msra.mxu0 0.0
    %530 = vmatprep.subr.mxu0 0.0
    %531 = vmatpush2.msra.mxu0 0.0
    %532 = vmatprep.subr.mxu0 0.0
    %533 = vmatpush2.msra.mxu0 0.0
    %534 = vmatprep.subr.mxu0 0.0
    %535 = vmatpush2.msra.mxu0 0.0
    %536 = vmatprep.subr.mxu0 0.0
    %537 = vmatpush2.msra.mxu0 0.0
    %538 = vmatprep.subr.mxu0 0.0
    %539 = vmatpush2.msra.mxu0 0.0
    %540 = vmatprep.subr.mxu0 0.0
    %541 = vmatpush2.msra.mxu0 0.0
    %542 = vmatprep.subr.mxu0 0.0
    %543 = vmatpush2.msra.mxu0 0.0
    %544 = vmatprep.subr.mxu0 0.0
    %545 = vmatpush2.msra.mxu0 0.0
    %546 = vmatprep.subr.mxu0 0.0
    %547 = vmatpush2.msra.mxu0 0.0
    %548 = vmatprep.subr.mxu0 0.0
    %549 = vmatpush2.msra.mxu0 0.0
    %550 = vmatprep.subr.mxu0 0.0
    %551 = vmatpush2.msra.mxu0 0.0
    %552 = vmatprep.subr.mxu0 0.0
    %553 = vmatpush2.msra.mxu0 0.0
    %554 = vmatprep.subr.mxu0 0.0
    %555 = vmatpush2.msra.mxu0 0.0
    %556 = vmatprep.subr.mxu0 0.0
    %557 = vmatpush2.msra.mxu0 0.0
    %558 = vmatprep.subr.mxu0 0.0
    %559 = vmatpush2.msra.mxu0 0.0
    %560 = vmatprep.mubr.f32.mxu0 0.0
    %561 = vmatmul.mubr.f32.gmra.mxu0 %v485
    %v562 = vpop.f32.mrf.mxu0
    %v563 = vadd.f32 %v105, %v562
    %v564 = vpop.f32.mrf.mxu0
    %565 = vmatprep.mubr.f32.mxu0 0.0
    %566 = vmatmul.mubr.f32.gmra.mxu0 %v488
    %v567 = vpop.f32.mrf.mxu0
    %v568 = vadd.f32 %v106, %v567
    %v569 = vpop.f32.mrf.mxu0
    %570 = vmatprep.mubr.f32.mxu0 0.0
    %571 = vmatmul.mubr.f32.gmra.mxu0 %v491
    %v572 = vpop.f32.mrf.mxu0
    %v573 = vadd.f32 %v107, %v572
    %v574 = vpop.f32.mrf.mxu0
    %575 = vmatprep.mubr.f32.mxu0 0.0
    %576 = vmatmul.mubr.f32.gmra.mxu0 %v494
    %v577 = vpop.f32.mrf.mxu0
    %v578 = vadd.f32 %v108, %v577
    %v579 = vpop.f32.mrf.mxu0
    %580 = vdwg.mxu0
    %v581 = vsel %vm39, %v563, 0.0
    %582 = vadd.xlane.f32.xlu0 %v581
    %v583 = vpop.xlane.xlu0 %582
    %v584 = vsel %vm39, %v568, 0.0
    %585 = vadd.xlane.f32.xlu0 %v584
    %v586 = vpop.xlane.xlu0 %585
    %v587 = vsel %vm39, %v573, 0.0
    %588 = vadd.xlane.f32.xlu0 %v587
    %v589 = vpop.xlane.xlu0 %588
    %v590 = vsel %vm39, %v578, 0.0
    %591 = vadd.xlane.f32.xlu0 %v590
    %v592 = vpop.xlane.xlu0 %591
    %v593 = vmul.f32 %v583, %v52
    %v594 = vmul.f32 %v586, %v52
    %v595 = vmul.f32 %v589, %v52
    %v596 = vmul.f32 %v592, %v52
    %v597 = vsub.f32 %v563, %v593
    %v598 = vsub.f32 %v568, %v594
    %v599 = vsub.f32 %v573, %v595
    %v600 = vsub.f32 %v578, %v596
    %v601 = vmul.f32 %v597, %v597
    %v602 = vmul.f32 %v598, %v598
    %v603 = vmul.f32 %v599, %v599
    %v604 = vmul.f32 %v600, %v600
    %v605 = vsel %vm39, %v601, 0.0
    %606 = vadd.xlane.f32.xlu0 %v605
    %v607 = vpop.xlane.xlu0 %606
    %v608 = vsel %vm39, %v602, 0.0
    %609 = vadd.xlane.f32.xlu0 %v608
    %v610 = vpop.xlane.xlu0 %609
    %v611 = vsel %vm39, %v603, 0.0
    %612 = vadd.xlane.f32.xlu0 %v611
    %v613 = vpop.xlane.xlu0 %612
    %v614 = vsel %vm39, %v604, 0.0
    %615 = vadd.xlane.f32.xlu0 %v614
    %v616 = vpop.xlane.xlu0 %615
    %v617 = vmul.f32 %v607, %v52
    %v618 = vmul.f32 %v610, %v52
    %v619 = vmul.f32 %v613, %v52
    %v620 = vmul.f32 %v616, %v52
    %v621 = vadd.f32 %v617, 1e-06
    %v622 = vadd.f32 %v618, 1e-06
    %v623 = vadd.f32 %v619, 1e-06
    %v624 = vadd.f32 %v620, 1e-06
    %v625 = vrsqrt.pop %v621
    %v626 = vrsqrt.pop %v622
    %v627 = vrsqrt.pop %v623
    %v628 = vrsqrt.pop %v624
    %v629 = vmul.f32 %v597, %v625
    %v630 = vmul.f32 %v598, %v626
    %v631 = vmul.f32 %v599, %v627
    %v632 = vmul.f32 %v600, %v628
    %v633 = vlaneseq
    %v634 = vshrl.u32 %v633, 7
    %v635 = vsub.s32 0, %v634
    %v636 = vrot.slane %v33, %v635
    %v637 = vmul.f32 %v629, %v636
    %v638 = vmul.f32 %v630, %v636
    %v639 = vmul.f32 %v631, %v636
    %v640 = vmul.f32 %v632, %v636
    %v641 = vlaneseq
    %v642 = vshrl.u32 %v641, 7
    %v643 = vsub.s32 0, %v642
    %v644 = vrot.slane %v34, %v643
    %v645 = vadd.f32 %v637, %v644
    %v646 = vadd.f32 %v638, %v644
    %v647 = vadd.f32 %v639, %v644
    %v648 = vadd.f32 %v640, %v644
    %v649 = vld [vmem:[%s5] sm:$0xff]
    %v650 = vld [vmem:[%s5 + $0x8] sm:$0xff]
    %v651 = vld [vmem:[%s5 + $0x10] sm:$0xff]
    %v652 = vld [vmem:[%s5 + $0x18] sm:$0xff]
    %v653 = vlaneseq
    %v654 = vshrl.u32 %v653, 7
    %v655 = vsub.s32 0, %v654
    %v656 = vrot.slane %v37, %v655
    %v658 = vsel %vm39, %v645, 0
    %v661 = vsel %vm39, %v646, 0
    %v664 = vsel %vm39, %v647, 0
    %v667 = vsel %vm39, %v648, 0
    %669 = vmatprep.subr.mxu0 0.0
    %670 = vmatpush1.msra.mxu0 0.0
    %671 = vmatprep.subr.mxu0 0.0
    %672 = vmatpush1.msra.mxu0 0.0
    %673 = vmatprep.subr.mxu0 0.0
    %674 = vmatpush1.msra.mxu0 0.0
    %675 = vmatprep.subr.mxu0 0.0
    %676 = vmatpush1.msra.mxu0 0.0
    %677 = vmatprep.subr.mxu0 0.0
    %678 = vmatpush1.msra.mxu0 0.0
    %679 = vmatprep.subr.mxu0 0.0
    %680 = vmatpush1.msra.mxu0 0.0
    %681 = vmatprep.subr.mxu0 0.0
    %682 = vmatpush1.msra.mxu0 0.0
    %683 = vmatprep.subr.mxu0 0.0
    %684 = vmatpush1.msra.mxu0 0.0
    %685 = vmatprep.subr.mxu0 0.0
    %686 = vmatpush1.msra.mxu0 0.0
    %687 = vmatprep.subr.mxu0 0.0
    %688 = vmatpush1.msra.mxu0 0.0
    %689 = vmatprep.subr.mxu0 0.0
    %690 = vmatpush1.msra.mxu0 0.0
    %691 = vmatprep.subr.mxu0 0.0
    %692 = vmatpush1.msra.mxu0 0.0
    %693 = vmatprep.subr.mxu0 0.0
    %694 = vmatpush1.msra.mxu0 %v652
    %695 = vmatprep.subr.mxu0 0.0
    %696 = vmatpush1.msra.mxu0 %v651
    %697 = vmatprep.subr.mxu0 0.0
    %698 = vmatpush1.msra.mxu0 %v650
    %699 = vmatprep.subr.mxu0 0.0
    %700 = vmatpush1.msra.mxu0 %v649
    %701 = vmatprep.subr.mxu0 0.0
    %702 = vmatpush2.msra.mxu0 0.0
    %703 = vmatprep.subr.mxu0 0.0
    %704 = vmatpush2.msra.mxu0 0.0
    %705 = vmatprep.subr.mxu0 0.0
    %706 = vmatpush2.msra.mxu0 0.0
    %707 = vmatprep.subr.mxu0 0.0
    %708 = vmatpush2.msra.mxu0 0.0
    %709 = vmatprep.subr.mxu0 0.0
    %710 = vmatpush2.msra.mxu0 0.0
    %711 = vmatprep.subr.mxu0 0.0
    %712 = vmatpush2.msra.mxu0 0.0
    %713 = vmatprep.subr.mxu0 0.0
    %714 = vmatpush2.msra.mxu0 0.0
    %715 = vmatprep.subr.mxu0 0.0
    %716 = vmatpush2.msra.mxu0 0.0
    %717 = vmatprep.subr.mxu0 0.0
    %718 = vmatpush2.msra.mxu0 0.0
    %719 = vmatprep.subr.mxu0 0.0
    %720 = vmatpush2.msra.mxu0 0.0
    %721 = vmatprep.subr.mxu0 0.0
    %722 = vmatpush2.msra.mxu0 0.0
    %723 = vmatprep.subr.mxu0 0.0
    %724 = vmatpush2.msra.mxu0 0.0
    %725 = vmatprep.subr.mxu0 0.0
    %726 = vmatpush2.msra.mxu0 0.0
    %727 = vmatprep.subr.mxu0 0.0
    %728 = vmatpush2.msra.mxu0 0.0
    %729 = vmatprep.subr.mxu0 0.0
    %730 = vmatpush2.msra.mxu0 0.0
    %731 = vmatprep.subr.mxu0 0.0
    %732 = vmatpush2.msra.mxu0 0.0
    %733 = vmatprep.mubr.f32.mxu0 0.0
    %734 = vmatmul.mubr.f32.gmra.mxu0 %v658
    %v735 = vpop.f32.mrf.mxu0
    %v736 = vadd.f32 %v656, %v735
    %v737 = vpop.f32.mrf.mxu0
    %738 = vmatprep.mubr.f32.mxu0 0.0
    %739 = vmatmul.mubr.f32.gmra.mxu0 %v661
    %v740 = vpop.f32.mrf.mxu0
    %v741 = vadd.f32 %v656, %v740
    %v742 = vpop.f32.mrf.mxu0
    %743 = vmatprep.mubr.f32.mxu0 0.0
    %744 = vmatmul.mubr.f32.gmra.mxu0 %v664
    %v745 = vpop.f32.mrf.mxu0
    %v746 = vadd.f32 %v656, %v745
    %v747 = vpop.f32.mrf.mxu0
    %748 = vmatprep.mubr.f32.mxu0 0.0
    %749 = vmatmul.mubr.f32.gmra.mxu0 %v667
    %v750 = vpop.f32.mrf.mxu0
    %v751 = vadd.f32 %v656, %v750
    %v752 = vpop.f32.mrf.mxu0
    %753 = vdwg.mxu0
    %v754 = vmul.f32 %v736, 0.5
    %v755 = vmul.f32 %v741, 0.5
    %v756 = vmul.f32 %v746, 0.5
    %v757 = vmul.f32 %v751, 0.5
    %v758 = vmul.f32 %v736, 0.044715
    %v759 = vmul.f32 %v741, 0.044715
    %v760 = vmul.f32 %v746, 0.044715
    %v761 = vmul.f32 %v751, 0.044715
    %v762 = vmul.f32 %v758, %v736
    %v763 = vmul.f32 %v759, %v741
    %v764 = vmul.f32 %v760, %v746
    %v765 = vmul.f32 %v761, %v751
    %v766 = vmul.f32 %v762, %v736
    %v767 = vmul.f32 %v763, %v741
    %v768 = vmul.f32 %v764, %v746
    %v769 = vmul.f32 %v765, %v751
    %v770 = vadd.f32 %v736, %v766
    %v771 = vadd.f32 %v741, %v767
    %v772 = vadd.f32 %v746, %v768
    %v773 = vadd.f32 %v751, %v769
    %v774 = vmul.f32 %v770, 0.7978846
    %v775 = vmul.f32 %v771, 0.7978846
    %v776 = vmul.f32 %v772, 0.7978846
    %v777 = vmul.f32 %v773, 0.7978846
    %v778 = vtanh.pop %v774
    %v779 = vtanh.pop %v775
    %v780 = vtanh.pop %v776
    %v781 = vtanh.pop %v777
    %v782 = vadd.f32 %v778, 1.0
    %v783 = vadd.f32 %v779, 1.0
    %v784 = vadd.f32 %v780, 1.0
    %v785 = vadd.f32 %v781, 1.0
    %v786 = vmul.f32 %v754, %v782
    %v787 = vmul.f32 %v755, %v783
    %v788 = vmul.f32 %v756, %v784
    %v789 = vmul.f32 %v757, %v785
    %v790 = vld [vmem:[%s6] sm:$0xff]
    %v791 = vld [vmem:[%s6 + $0x8] sm:$0xff]
    %v792 = vld [vmem:[%s6 + $0x10] sm:$0xff]
    %v793 = vld [vmem:[%s6 + $0x18] sm:$0xff]
    %v794 = vld [vmem:[%s6 + $0x20] sm:$0xff]
    %v795 = vld [vmem:[%s6 + $0x28] sm:$0xff]
    %v796 = vld [vmem:[%s6 + $0x30] sm:$0xff]
    %v797 = vld [vmem:[%s6 + $0x38] sm:$0xff]
    %v798 = vld [vmem:[%s6 + $0x40] sm:$0xff]
    %v799 = vld [vmem:[%s6 + $0x48] sm:$0xff]
    %v800 = vld [vmem:[%s6 + $0x50] sm:$0xff]
    %v801 = vld [vmem:[%s6 + $0x58] sm:$0xff]
    %v802 = vld [vmem:[%s6 + $0x60] sm:$0xff]
    %v803 = vld [vmem:[%s6 + $0x68] sm:$0xff]
    %v804 = vld [vmem:[%s6 + $0x70] sm:$0xff]
    %v805 = vld [vmem:[%s6 + $0x78] sm:$0xff]
    %v806 = vlaneseq
    %v807 = vshrl.u32 %v806, 7
    %v808 = vsub.s32 0, %v807
    %v809 = vrot.slane %v38, %v808
    %810 = vmatprep.subr.mxu0 0.0
    %811 = vmatpush1.msra.mxu0 %v805
    %812 = vmatprep.subr.mxu0 0.0
    %813 = vmatpush1.msra.mxu0 %v804
    %814 = vmatprep.subr.mxu0 0.0
    %815 = vmatpush1.msra.mxu0 %v803
    %816 = vmatprep.subr.mxu0 0.0
    %817 = vmatpush1.msra.mxu0 %v802
    %818 = vmatprep.subr.mxu0 0.0
    %819 = vmatpush1.msra.mxu0 %v801
    %820 = vmatprep.subr.mxu0 0.0
    %821 = vmatpush1.msra.mxu0 %v800
    %822 = vmatprep.subr.mxu0 0.0
    %823 = vmatpush1.msra.mxu0 %v799
    %824 = vmatprep.subr.mxu0 0.0
    %825 = vmatpush1.msra.mxu0 %v798
    %826 = vmatprep.subr.mxu0 0.0
    %827 = vmatpush1.msra.mxu0 %v797
    %828 = vmatprep.subr.mxu0 0.0
    %829 = vmatpush1.msra.mxu0 %v796
    %830 = vmatprep.subr.mxu0 0.0
    %831 = vmatpush1.msra.mxu0 %v795
    %832 = vmatprep.subr.mxu0 0.0
    %833 = vmatpush1.msra.mxu0 %v794
    %834 = vmatprep.subr.mxu0 0.0
    %835 = vmatpush1.msra.mxu0 %v793
    %836 = vmatprep.subr.mxu0 0.0
    %837 = vmatpush1.msra.mxu0 %v792
    %838 = vmatprep.subr.mxu0 0.0
    %839 = vmatpush1.msra.mxu0 %v791
    %840 = vmatprep.subr.mxu0 0.0
    %841 = vmatpush1.msra.mxu0 %v790
    %842 = vmatprep.subr.mxu0 0.0
    %843 = vmatpush2.msra.mxu0 0.0
    %844 = vmatprep.subr.mxu0 0.0
    %845 = vmatpush2.msra.mxu0 0.0
    %846 = vmatprep.subr.mxu0 0.0
    %847 = vmatpush2.msra.mxu0 0.0
    %848 = vmatprep.subr.mxu0 0.0
    %849 = vmatpush2.msra.mxu0 0.0
    %850 = vmatprep.subr.mxu0 0.0
    %851 = vmatpush2.msra.mxu0 0.0
    %852 = vmatprep.subr.mxu0 0.0
    %853 = vmatpush2.msra.mxu0 0.0
    %854 = vmatprep.subr.mxu0 0.0
    %855 = vmatpush2.msra.mxu0 0.0
    %856 = vmatprep.subr.mxu0 0.0
    %857 = vmatpush2.msra.mxu0 0.0
    %858 = vmatprep.subr.mxu0 0.0
    %859 = vmatpush2.msra.mxu0 0.0
    %860 = vmatprep.subr.mxu0 0.0
    %861 = vmatpush2.msra.mxu0 0.0
    %862 = vmatprep.subr.mxu0 0.0
    %863 = vmatpush2.msra.mxu0 0.0
    %864 = vmatprep.subr.mxu0 0.0
    %865 = vmatpush2.msra.mxu0 0.0
    %866 = vmatprep.subr.mxu0 0.0
    %867 = vmatpush2.msra.mxu0 0.0
    %868 = vmatprep.subr.mxu0 0.0
    %869 = vmatpush2.msra.mxu0 0.0
    %870 = vmatprep.subr.mxu0 0.0
    %871 = vmatpush2.msra.mxu0 0.0
    %872 = vmatprep.subr.mxu0 0.0
    %873 = vmatpush2.msra.mxu0 0.0
    %874 = vmatprep.mubr.f32.mxu0 0.0
    %875 = vmatmul.mubr.f32.gmra.mxu0 %v786
    %v876 = vpop.f32.mrf.mxu0
    %v877 = vadd.f32 %v809, %v876
    %v878 = vpop.f32.mrf.mxu0
    %879 = vmatprep.mubr.f32.mxu0 0.0
    %880 = vmatmul.mubr.f32.gmra.mxu0 %v787
    %v881 = vpop.f32.mrf.mxu0
    %v882 = vadd.f32 %v809, %v881
    %v883 = vpop.f32.mrf.mxu0
    %884 = vmatprep.mubr.f32.mxu0 0.0
    %885 = vmatmul.mubr.f32.gmra.mxu0 %v788
    %v886 = vpop.f32.mrf.mxu0
    %v887 = vadd.f32 %v809, %v886
    %v888 = vpop.f32.mrf.mxu0
    %889 = vmatprep.mubr.f32.mxu0 0.0
    %890 = vmatmul.mubr.f32.gmra.mxu0 %v789
    %v891 = vpop.f32.mrf.mxu0
    %v892 = vadd.f32 %v809, %v891
    %v893 = vpop.f32.mrf.mxu0
    %894 = vdwg.mxu0
    %v895 = vadd.f32 %v877, %v27
    %v896 = vadd.f32 %v882, %v28
    %v897 = vadd.f32 %v887, %v29
    %v898 = vadd.f32 %v892, %v30
    %899 = vst.msk [vmem:[#allocation2] sm:$0xff] %vm39, %v895
    %900 = vst.msk [vmem:[#allocation2 + $0x8] sm:$0xff] %vm39, %v896
    %901 = vst.msk [vmem:[#allocation2 + $0x10] sm:$0xff] %vm39, %v897
    %902 = vst.msk [vmem:[#allocation2 + $0x18] sm:$0xff] %vm39, %v898
    // Predicated region
    $region30: #{tpu_custom_call.1} parent=1 // pred_check
      _
    $region31: #{tpu_custom_call.1} parent=1 // pred_check_branch
      %904 = sbr.rel (0) target = $region33
    $region32: #{tpu_custom_call.1} parent=1 // pred_region
      %s906 = ssub.s32 512, 512
      %907 = vsyncadd [#allocation3], %s906
      %s908 = sshll.u32 [#allocation2], 4
      %s909 = int_to_ptr.vmem [resolvable:$true] %s908
      %914 = dma.vmem_to_hbm [thread:$0]  %s909, 512, %s7, [#allocation3], 128, 128, 8
    $region33: #{tpu_custom_call.1} parent=1 // pred_fallthru
      _
    // Predicated region
    $region34: #{tpu_custom_call.1} parent=1 // pred_check
      _
    $region35: #{tpu_custom_call.1} parent=1 // pred_check_branch
      %916 = sbr.rel (0) target = $region37
    $region36: #{tpu_custom_call.1} parent=1 // pred_region
      %917 = dma.done [#allocation3], 512
    $region37: #{tpu_custom_call.1} parent=1 // pred_fallthru
      _
    %918 = vsyncpa [#allocation3], 1

</llo_original>
